<compile_context>
chip_gen: v7x
topology: tpu7x:2x2x1
jax: 0.10.0
libtpu: 0.0.40
codegen_flags: <defaults>
</compile_context>

<pallas_src>
import jax
import jax.numpy as jnp
from jax.experimental import pallas as pl
from jax.experimental.pallas import tpu as pltpu


def _round_up(x, m):
    return (x + m - 1) // m * m


def _outconv_kernel(w_ref, b_ref, cols_ref, o_ref):
    # w_ref:    (C_out, K*C_in)     -- resident across the grid
    # b_ref:    (C_out, 1)          -- resident across the grid
    # cols_ref: (K*C_in, TILE_P)    -- streamed
    # o_ref:    (C_out, TILE_P)     -- streamed, lane-dense
    acc = jnp.dot(w_ref[...], cols_ref[...],
                  preferred_element_type=jnp.float32)
    o_ref[...] = (acc + b_ref[...]).astype(o_ref.dtype)


def outconv_pallas(x_nchw, weight, bias, *, tile_p=2048):
    """x_nchw: (N, Cin, H, W); weight: (Cout, Cin, 1, K); bias: (Cout,).

    Returns (N, Cout, H, W - K + 1), matching nn.Conv2d(kernel_size=(1, K)).
    """
    n, c_in, h, w = x_nchw.shape
    c_out, c_in_w, kh, k = weight.shape
    assert c_in_w == c_in and kh == 1
    w_out = w - k + 1
    kc = k * c_in
    p = n * h * w_out

    # ---- plain-JAX layout glue (pure data movement) -----------------------
    # im2col: cols[j*C_in + c, ((n*H + h)*W_out + w')] = x[n, c, h, w' + j]
    taps = jnp.stack([x_nchw[:, :, :, j:j + w_out] for j in range(k)], axis=0)
    cols = jnp.transpose(taps, (0, 2, 1, 3, 4)).reshape(kc, p)
    # W_mat[o, j*C_in + c] = weight[o, c, 0, j]
    w_mat = jnp.transpose(weight[:, :, 0, :], (0, 2, 1)).reshape(c_out, kc)
    b_col = bias.reshape(c_out, 1)

    # Lane-aligned tiles (multiples of 128); pad P so the grid divides evenly.
    tile_p = max(128, min(tile_p, _round_up(p, 128)))
    p_pad = _round_up(p, tile_p)
    if p_pad != p:
        cols = jnp.pad(cols, ((0, 0), (0, p_pad - p)))
    grid = (p_pad // tile_p,)

    cost = pl.CostEstimate(
        flops=2 * c_out * kc * p_pad,
        transcendentals=0,
        bytes_accessed=(kc * p_pad + c_out * kc + c_out + c_out * p_pad)
        * x_nchw.dtype.itemsize,
    )

    out_flat = pl.pallas_call(
        _outconv_kernel,
        out_shape=jax.ShapeDtypeStruct((c_out, p_pad), x_nchw.dtype),
        grid_spec=pltpu.PrefetchScalarGridSpec(
            num_scalar_prefetch=0,
            grid=grid,
            in_specs=[
                pl.BlockSpec((c_out, kc), lambda i: (0, 0)),    # repacked weight
                pl.BlockSpec((c_out, 1), lambda i: (0, 0)),     # bias column
                pl.BlockSpec((kc, tile_p), lambda i: (0, i)),   # im2col columns
            ],
            out_specs=pl.BlockSpec((c_out, tile_p), lambda i: (0, i)),
        ),
        compiler_params=pltpu.CompilerParams(
            dimension_semantics=("parallel",),
            vmem_limit_bytes=64 * 1024 * 1024,
        ),
        cost_estimate=cost,
    )(w_mat, b_col, cols)

    # Strip padding and return PyTorch's NCHW convention: (N, Cout, H, W_out).
    out = out_flat[:, :p].reshape(c_out, n, h, w_out)
    return jnp.transpose(out, (1, 0, 2, 3))


def outconv_reference(x_nchw, weight, bias):
    out = jax.lax.conv_general_dilated(
        x_nchw, weight,
        window_strides=(1, 1),
        padding="VALID",
        dimension_numbers=("NCHW", "OIHW", "NCHW"),
    )
    return out + bias.reshape(1, -1, 1, 1)


if __name__ == "__main__":
    key = jax.random.PRNGKey(0)
    k_x, k_w, k_b = jax.random.split(key, 3)

    # Shapes consistent with OutConv(in_channels=4, out_channels=3, n_collapse=4)
    N, C_IN, H, W = 2, 4, 16, 16
    C_OUT, N_COLLAPSE = 3, 4

    x = jax.random.normal(k_x, (N, C_IN, H, W), dtype=jnp.float32)
    weight = jax.random.normal(
        k_w, (C_OUT, C_IN, 1, N_COLLAPSE), dtype=jnp.float32) * 0.1
    bias = jax.random.normal(k_b, (C_OUT,), dtype=jnp.float32) * 0.1

    out = jax.block_until_ready(outconv_pallas(x, weight, bias))
    ref = jax.block_until_ready(outconv_reference(x, weight, bias))

    assert out.shape == (N, C_OUT, H, W - N_COLLAPSE + 1), out.shape
    assert jnp.allclose(out, ref, atol=1e-5, rtol=1e-5), float(
        jnp.max(jnp.abs(out - ref)))
    print("KERNEL_OK")
</pallas_src>

<mosaic_0001>
module attributes {stable_mosaic.version = 11 : i64} {
  func.func @_outconv_kernel(%arg0: i32, %arg1: memref<3x16xf32, #tpu.memory_space<vmem>>, %arg2: memref<3x1xf32, #tpu.memory_space<vmem>>, %arg3: memref<16x512xf32, #tpu.memory_space<vmem>>, %arg4: memref<3x512xf32, #tpu.memory_space<vmem>>) attributes {dimension_semantics = [#tpu.dimension_semantics<parallel>], iteration_bounds = array<i64: 1>, scalar_prefetch = 0 : i64, scratch_operands = 0 : i64, tpu.core_type = #tpu.core_type<tc>, window_params = [{pipeline_mode = #tpu.pipeline_mode<synchronous>, transform_indices = @transform_0, window_bounds = array<i64: 3, 16>}, {pipeline_mode = #tpu.pipeline_mode<synchronous>, transform_indices = @transform_1, window_bounds = array<i64: 3, 1>}, {transform_indices = @transform_2, window_bounds = array<i64: 16, 512>}, {transform_indices = @transform_3, window_bounds = array<i64: 3, 512>}]} {
    %c0 = arith.constant 0 : index
    %c0_0 = arith.constant 0 : index
    %0 = vector.load %arg1[%c0, %c0_0] : memref<3x16xf32, #tpu.memory_space<vmem>>, vector<3x16xf32>
    %c0_1 = arith.constant 0 : index
    %c0_2 = arith.constant 0 : index
    %1 = vector.load %arg3[%c0_1, %c0_2] : memref<16x512xf32, #tpu.memory_space<vmem>>, vector<16x512xf32>
    %cst = arith.constant dense<0.000000e+00> : vector<3x512xf32>
    %2 = tpu.matmul %0, %1, %cst {dimension_numbers = #tpu.dot_dimension_numbers<[1], [0], [0], [1], [0, 0, 1, 1], [], []>} : vector<3x16xf32>, vector<16x512xf32>, vector<3x512xf32> -> vector<3x512xf32>
    %c0_3 = arith.constant 0 : index
    %c0_4 = arith.constant 0 : index
    %3 = vector.load %arg2[%c0_3, %c0_4] : memref<3x1xf32, #tpu.memory_space<vmem>>, vector<3x1xf32>
    %4 = vector.broadcast %3 : vector<3x1xf32> to vector<3x512xf32>
    %5 = arith.addf %2, %4 : vector<3x512xf32>
    %c0_5 = arith.constant 0 : index
    %c0_6 = arith.constant 0 : index
    %6 = vector.load %arg4[%c0_5, %c0_6] : memref<3x512xf32, #tpu.memory_space<vmem>>, vector<3x512xf32>
    tpu.vector_store %arg4[%c0_5, %c0_6], %5 {strides = array<i32>} : memref<3x512xf32, #tpu.memory_space<vmem>>, vector<3x512xf32>,
    return
  }
  func.func @transform_0(%arg0: i32) -> (i32, i32) {
    %c0_i32 = arith.constant 0 : i32
    %c0_i32_0 = arith.constant 0 : i32
    %c0_i32_1 = arith.constant 0 : i32
    return %c0_i32, %c0_i32_0 : i32, i32
  }
  func.func @transform_1(%arg0: i32) -> (i32, i32) {
    %c0_i32 = arith.constant 0 : i32
    %c0_i32_0 = arith.constant 0 : i32
    %c0_i32_1 = arith.constant 0 : i32
    return %c0_i32, %c0_i32_0 : i32, i32
  }
  func.func @transform_2(%arg0: i32) -> (i32, i32) {
    %c0_i32 = arith.constant 0 : i32
    %c0_i32_0 = arith.constant 0 : i32
    return %c0_i32, %arg0 : i32, i32
  }
  func.func @transform_3(%arg0: i32) -> (i32, i32) {
    %c0_i32 = arith.constant 0 : i32
    %c0_i32_0 = arith.constant 0 : i32
    return %c0_i32, %arg0 : i32, i32
  }
}

</mosaic_0001>

<llo_original>
// kernel: tpu_custom_call.1
$region0: #{tpu_custom_call.1}
  #allocation0 [shape = 'u32[]', space=smem, size = 0x4, offset = 0x4, fixed_abs, tag = 'smem constant byte address 0x4 - core index']
  #allocation1 [shape = 'u32[144,128]{1,0:T(1,128)}', space=vmem, size = 0x12000, scoped, tag = 'internal scratch']
  %s0 = inlined_call_operand.hbm [shape: f32[3,16], index: 0, kind: input, shape index: {}]
  %s1 = inlined_call_operand.hbm [shape: f32[3,1], index: 1, kind: input, shape index: {}]
  %s2 = inlined_call_operand.hbm [shape: f32[16,512], index: 2, kind: input, shape index: {}]
  %s3 = inlined_call_operand.hbm [shape: f32[3,512], index: 3, kind: output, shape index: {}]
  %s4 = sld [smem:[#allocation0]]
  $region34: #{tpu_custom_call.1} parent=0
    _
  %s6 = ssub.s32 1, %s4
  %s7 = scalar_select 0, %s6, %s4
  $region1: #{tpu_custom_call.1} parent=0
    #allocation2 [shape = 'u8[2048]{0}', space=vmem, size = 0x800, scoped, tag = 'input window, operand 0, single buffered']
    #allocation3 [shape = 's32[1]{0}', space=sflag, size = 0x4, scoped, tag = 'scoped memory for tpu_custom_call.1']
    #allocation4 [shape = 's32[1]{0}', space=sflag, size = 0x4, scoped, tag = 'scoped memory for tpu_custom_call.1']
    #allocation5 [shape = 'u8[2048]{0}', space=vmem, size = 0x800, scoped, tag = 'input window, operand 1, single buffered']
    #allocation6 [shape = 's32[1]{0}', space=sflag, size = 0x4, scoped, tag = 'scoped memory for tpu_custom_call.1']
    #allocation7 [shape = 'u8[32768]{0}', space=vmem, size = 0x8000, scoped, tag = 'input window, operand 2, single buffered']
    #allocation8 [shape = 'u8[8192]{0}', space=vmem, size = 0x2000, scoped, tag = 'output window, operand 0, single buffered']
    %8 = vsyncpa [#allocation3], 0
    %9 = vsyncpa [#allocation6], 0
    %10 = vsyncpa [#allocation4], 0
    // Predicated region
    $region2: #{tpu_custom_call.1} parent=1 // pred_check
      _
    $region3: #{tpu_custom_call.1} parent=1 // pred_check_branch
      %12 = sbr.rel (0) target = $region5
    $region4: #{tpu_custom_call.1} parent=1 // pred_region
      %s14 = ssub.s32 64, 64
      %15 = vsyncadd [#allocation3], %s14
      %s17 = sshll.u32 [#allocation2], 4
      %s18 = int_to_ptr.vmem [resolvable:$true] %s17
      %20 = dma.hbm_to_vmem [thread:$0]  %s0, 64, %s18, [#allocation3]
    $region5: #{tpu_custom_call.1} parent=1 // pred_fallthru
      _
    // Predicated region
    $region6: #{tpu_custom_call.1} parent=1 // pred_check
      _
    $region7: #{tpu_custom_call.1} parent=1 // pred_check_branch
      %22 = sbr.rel (0) target = $region9
    $region8: #{tpu_custom_call.1} parent=1 // pred_region
      %s24 = ssub.s32 64, 64
      %25 = vsyncadd [#allocation6], %s24
      %s27 = sshll.u32 [#allocation5], 4
      %s28 = int_to_ptr.vmem [resolvable:$true] %s27
      %30 = dma.hbm_to_vmem [thread:$0]  %s1, 64, %s28, [#allocation6]
    $region9: #{tpu_custom_call.1} parent=1 // pred_fallthru
      _
    // Predicated region
    $region10: #{tpu_custom_call.1} parent=1 // pred_check
      _
    $region11: #{tpu_custom_call.1} parent=1 // pred_check_branch
      %32 = sbr.rel (0) target = $region13
    $region12: #{tpu_custom_call.1} parent=1 // pred_region
      %s34 = ssub.s32 1024, 1024
      %35 = vsyncadd [#allocation6], %s34
      %s36 = sshll.u32 [#allocation7], 4
      %s37 = int_to_ptr.vmem [resolvable:$true] %s36
      %42 = dma.hbm_to_vmem [thread:$0]  %s2, 1024, %s37, [#allocation6], 512, 512, 32
    $region13: #{tpu_custom_call.1} parent=1 // pred_fallthru
      _
    // Predicated region
    $region14: #{tpu_custom_call.1} parent=1 // pred_check
      _
    $region15: #{tpu_custom_call.1} parent=1 // pred_check_branch
      %44 = sbr.rel (0) target = $region17
    $region16: #{tpu_custom_call.1} parent=1 // pred_region
      %45 = dma.done [#allocation3], 64
    $region17: #{tpu_custom_call.1} parent=1 // pred_fallthru
      _
    // Predicated region
    $region18: #{tpu_custom_call.1} parent=1 // pred_check
      _
    $region19: #{tpu_custom_call.1} parent=1 // pred_check_branch
      %47 = sbr.rel (0) target = $region21
    $region20: #{tpu_custom_call.1} parent=1 // pred_region
      %48 = dma.done [#allocation6], 64
    $region21: #{tpu_custom_call.1} parent=1 // pred_fallthru
      _
    // Predicated region
    $region22: #{tpu_custom_call.1} parent=1 // pred_check
      _
    $region23: #{tpu_custom_call.1} parent=1 // pred_check_branch
      %50 = sbr.rel (0) target = $region25
    $region24: #{tpu_custom_call.1} parent=1 // pred_region
      %51 = dma.done [#allocation6], 1024
    $region25: #{tpu_custom_call.1} parent=1 // pred_fallthru
      _
    %v52 = vld [vmem:[#allocation2] sm:$0x7]
    %v53 = vld [vmem:[#allocation7] sm:$0xff]
    %v54 = vld [vmem:[#allocation7 + $0x8] sm:$0xff]
    %v55 = vld [vmem:[#allocation7 + $0x10] sm:$0xff]
    %v56 = vld [vmem:[#allocation7 + $0x18] sm:$0xff]
    %v57 = vld [vmem:[#allocation7 + $0x20] sm:$0xff]
    %v58 = vld [vmem:[#allocation7 + $0x28] sm:$0xff]
    %v59 = vld [vmem:[#allocation7 + $0x30] sm:$0xff]
    %v60 = vld [vmem:[#allocation7 + $0x38] sm:$0xff]
    %v61 = vld [vmem:[#allocation5] sm:$0x7]
    %63 = vset.pattern.permute.xlu0 0
    %64 = vperm.xlu0 %63, %v61
    %v65 = vpop.permute.xlu0 %64
    %vm67 = vcmask 130048
    %v69 = vsel %vm67, %v52, 0
    %71 = vmatprep.subr.mxu0 %v54
    %72 = vmatpush1.msra.mxu0 %v53
    %73 = vmatprep.subr.mxu0 %v58
    %74 = vmatpush1.msra.mxu0 %v57
    %75 = vmatprep.subr.mxu0 0.0
    %76 = vmatpush1.msra.mxu0 0.0
    %77 = vmatprep.subr.mxu0 0.0
    %78 = vmatpush1.msra.mxu0 0.0
    %79 = vmatprep.subr.mxu0 0.0
    %80 = vmatpush1.msra.mxu0 0.0
    %81 = vmatprep.subr.mxu0 0.0
    %82 = vmatpush1.msra.mxu0 0.0
    %83 = vmatprep.subr.mxu0 0.0
    %84 = vmatpush1.msra.mxu0 0.0
    %85 = vmatprep.subr.mxu0 0.0
    %86 = vmatpush1.msra.mxu0 0.0
    %87 = vmatprep.subr.mxu0 0.0
    %88 = vmatpush1.msra.mxu0 0.0
    %89 = vmatprep.subr.mxu0 0.0
    %90 = vmatpush1.msra.mxu0 0.0
    %91 = vmatprep.subr.mxu0 0.0
    %92 = vmatpush1.msra.mxu0 0.0
    %93 = vmatprep.subr.mxu0 0.0
    %94 = vmatpush1.msra.mxu0 0.0
    %95 = vmatprep.subr.mxu0 0.0
    %96 = vmatpush1.msra.mxu0 0.0
    %97 = vmatprep.subr.mxu0 0.0
    %98 = vmatpush1.msra.mxu0 0.0
    %99 = vmatprep.subr.mxu0 0.0
    %100 = vmatpush1.msra.mxu0 0.0
    %101 = vmatprep.subr.mxu0 0.0
    %102 = vmatpush1.msra.mxu0 0.0
    %103 = vmatprep.subr.mxu0 0.0
    %104 = vmatpush1.msra.mxu0 0.0
    %105 = vmatprep.subr.mxu0 0.0
    %106 = vmatpush1.msra.mxu0 0.0
    %107 = vmatprep.subr.mxu0 0.0
    %108 = vmatpush1.msra.mxu0 0.0
    %109 = vmatprep.subr.mxu0 0.0
    %110 = vmatpush1.msra.mxu0 0.0
    %111 = vmatprep.subr.mxu0 0.0
    %112 = vmatpush1.msra.mxu0 0.0
    %113 = vmatprep.subr.mxu0 0.0
    %114 = vmatpush1.msra.mxu0 0.0
    %115 = vmatprep.subr.mxu0 0.0
    %116 = vmatpush1.msra.mxu0 0.0
    %117 = vmatprep.subr.mxu0 0.0
    %118 = vmatpush1.msra.mxu0 0.0
    %119 = vmatprep.subr.mxu0 0.0
    %120 = vmatpush1.msra.mxu0 0.0
    %121 = vmatprep.subr.mxu0 0.0
    %122 = vmatpush1.msra.mxu0 0.0
    %123 = vmatprep.subr.mxu0 0.0
    %124 = vmatpush1.msra.mxu0 0.0
    %125 = vmatprep.subr.mxu0 0.0
    %126 = vmatpush1.msra.mxu0 0.0
    %127 = vmatprep.subr.mxu0 0.0
    %128 = vmatpush1.msra.mxu0 0.0
    %129 = vmatprep.subr.mxu0 0.0
    %130 = vmatpush1.msra.mxu0 0.0
    %131 = vmatprep.subr.mxu0 0.0
    %132 = vmatpush1.msra.mxu0 0.0
    %133 = vmatprep.subr.mxu0 0.0
    %134 = vmatpush1.msra.mxu0 0.0
    %135 = vmatprep.mubr.f32.mxu0 0.0
    %136 = vmatmul.mubr.f32.gmra.mrb[0].mxu0 %v69
    %v137 = vpop.f32.mrb[0].mxu0
    %v138 = vadd.f32 %v65, %v137
    %v139 = vpop.f32.mrb[0].mxu0
    %v140 = vadd.f32 %v65, %v139
    %141 = vdwg.mxu0
    %142 = vmatprep.subr.mxu0 %v56
    %143 = vmatpush1.msra.mxu0 %v55
    %144 = vmatprep.subr.mxu0 %v60
    %145 = vmatpush1.msra.mxu0 %v59
    %146 = vmatprep.subr.mxu0 0.0
    %147 = vmatpush1.msra.mxu0 0.0
    %148 = vmatprep.subr.mxu0 0.0
    %149 = vmatpush1.msra.mxu0 0.0
    %150 = vmatprep.subr.mxu0 0.0
    %151 = vmatpush1.msra.mxu0 0.0
    %152 = vmatprep.subr.mxu0 0.0
    %153 = vmatpush1.msra.mxu0 0.0
    %154 = vmatprep.subr.mxu0 0.0
    %155 = vmatpush1.msra.mxu0 0.0
    %156 = vmatprep.subr.mxu0 0.0
    %157 = vmatpush1.msra.mxu0 0.0
    %158 = vmatprep.subr.mxu0 0.0
    %159 = vmatpush1.msra.mxu0 0.0
    %160 = vmatprep.subr.mxu0 0.0
    %161 = vmatpush1.msra.mxu0 0.0
    %162 = vmatprep.subr.mxu0 0.0
    %163 = vmatpush1.msra.mxu0 0.0
    %164 = vmatprep.subr.mxu0 0.0
    %165 = vmatpush1.msra.mxu0 0.0
    %166 = vmatprep.subr.mxu0 0.0
    %167 = vmatpush1.msra.mxu0 0.0
    %168 = vmatprep.subr.mxu0 0.0
    %169 = vmatpush1.msra.mxu0 0.0
    %170 = vmatprep.subr.mxu0 0.0
    %171 = vmatpush1.msra.mxu0 0.0
    %172 = vmatprep.subr.mxu0 0.0
    %173 = vmatpush1.msra.mxu0 0.0
    %174 = vmatprep.subr.mxu0 0.0
    %175 = vmatpush1.msra.mxu0 0.0
    %176 = vmatprep.subr.mxu0 0.0
    %177 = vmatpush1.msra.mxu0 0.0
    %178 = vmatprep.subr.mxu0 0.0
    %179 = vmatpush1.msra.mxu0 0.0
    %180 = vmatprep.subr.mxu0 0.0
    %181 = vmatpush1.msra.mxu0 0.0
    %182 = vmatprep.subr.mxu0 0.0
    %183 = vmatpush1.msra.mxu0 0.0
    %184 = vmatprep.subr.mxu0 0.0
    %185 = vmatpush1.msra.mxu0 0.0
    %186 = vmatprep.subr.mxu0 0.0
    %187 = vmatpush1.msra.mxu0 0.0
    %188 = vmatprep.subr.mxu0 0.0
    %189 = vmatpush1.msra.mxu0 0.0
    %190 = vmatprep.subr.mxu0 0.0
    %191 = vmatpush1.msra.mxu0 0.0
    %192 = vmatprep.subr.mxu0 0.0
    %193 = vmatpush1.msra.mxu0 0.0
    %194 = vmatprep.subr.mxu0 0.0
    %195 = vmatpush1.msra.mxu0 0.0
    %196 = vmatprep.subr.mxu0 0.0
    %197 = vmatpush1.msra.mxu0 0.0
    %198 = vmatprep.subr.mxu0 0.0
    %199 = vmatpush1.msra.mxu0 0.0
    %200 = vmatprep.subr.mxu0 0.0
    %201 = vmatpush1.msra.mxu0 0.0
    %202 = vmatprep.subr.mxu0 0.0
    %203 = vmatpush1.msra.mxu0 0.0
    %204 = vmatprep.subr.mxu0 0.0
    %205 = vmatpush1.msra.mxu0 0.0
    %206 = vmatprep.mubr.f32.mxu0 0.0
    %207 = vmatmul.mubr.f32.gmra.mrb[0].mxu0 %v69
    %v208 = vpop.f32.mrb[0].mxu0
    %v209 = vadd.f32 %v65, %v208
    %v210 = vpop.f32.mrb[0].mxu0
    %v211 = vadd.f32 %v65, %v210
    %212 = vdwg.mxu0
    %v217 = vcombine.low %v138, %v140
    %v218 = vcombine.low %v209, %v211
    %221 = vst [vmem:[#allocation8] sm:$0x77] %v217
    %222 = vst [vmem:[#allocation8 + $0x8] sm:$0x77] %v218
    // Predicated region
    $region26: #{tpu_custom_call.1} parent=1 // pred_check
      _
    $region27: #{tpu_custom_call.1} parent=1 // pred_check_branch
      %224 = sbr.rel (0) target = $region29
    $region28: #{tpu_custom_call.1} parent=1 // pred_region
      %s226 = ssub.s32 256, 256
      %227 = vsyncadd [#allocation4], %s226
      %s229 = sshll.u32 [#allocation8], 4
      %s230 = int_to_ptr.vmem [resolvable:$true] %s229
      %232 = dma.vmem_to_hbm [thread:$0]  %s230, 256, %s3, [#allocation4]
    $region29: #{tpu_custom_call.1} parent=1 // pred_fallthru
      _
    // Predicated region
    $region30: #{tpu_custom_call.1} parent=1 // pred_check
      _
    $region31: #{tpu_custom_call.1} parent=1 // pred_check_branch
      %234 = sbr.rel (0) target = $region33
    $region32: #{tpu_custom_call.1} parent=1 // pred_region
      %235 = dma.done [#allocation4], 256
    $region33: #{tpu_custom_call.1} parent=1 // pred_fallthru
      _
    %236 = vsyncpa [#allocation3], 1
    %237 = vsyncpa [#allocation6], 1
    %238 = vsyncpa [#allocation4], 1

</llo_original>
